<compile_context>
chip_gen: v7x
topology: tpu7x:2x2x1
jax: 0.10.0
libtpu: 0.0.40
codegen_flags: <defaults>
</compile_context>

<pallas_src>
import functools

import jax
import jax.numpy as jnp
from jax import lax
from jax.experimental import pallas as pl
from jax.experimental.pallas import tpu as pltpu

_LANE = 128
_SUB = 8


def _bce_kernel(pred_ref, targ_ref, out_ref, acc_ref, *, rows, row_tile, spp):
    p_idx = pl.program_id(0)   # parallel part (megacore shard)
    j = pl.program_id(1)       # reduction step within the part

    @pl.when(j == 0)
    def _():
        acc_ref[...] = jnp.zeros_like(acc_ref)

    # Global row id of each element in this tile; rows >= this are padding /
    # out-of-bounds (garbage) and get replaced with (p=1, t=1) -> loss == 0.
    base_row = (p_idx * spp + j) * row_tile
    row_ids = base_row + lax.broadcasted_iota(jnp.int32, (row_tile, _LANE), 0)
    valid = row_ids < rows

    p = jnp.where(valid, pred_ref[...].astype(jnp.float32), 1.0)
    t = jnp.where(valid, targ_ref[...].astype(jnp.float32), 1.0)

    # PyTorch BCELoss clamps the log terms at -100.
    log_p = jnp.maximum(jnp.log(p), -100.0)
    log_1mp = jnp.maximum(jnp.log(1.0 - p), -100.0)
    # Folded: -(t*log_p + (1-t)*log_1mp) == -(t*(log_p - log_1mp) + log_1mp)
    loss = -(t * (log_p - log_1mp) + log_1mp)

    # Fold the (row_tile, 128) tile down to an (8, 128) partial sum (VPU adds).
    acc_ref[...] += jnp.sum(loss.reshape(row_tile // _SUB, _SUB, _LANE), axis=0)

    @pl.when(j == pl.num_programs(1) - 1)
    def _():
        out_ref[...] = acc_ref[...]


def binary_cross_entropy(pred, target, *, row_tile=1024, num_parts=2):
    """Mean BCE over all elements (pred must be probabilities in [0, 1])."""
    assert pred.shape == target.shape
    n_valid = int(pred.size)

    flat_p = pred.reshape(-1)
    flat_t = target.reshape(-1)

    # Pad (only if needed) to a multiple of 8*128 elements so rows % 8 == 0.
    # Pad value p=1, t=1 contributes exactly 0 loss, so no mask stream needed.
    chunk = _SUB * _LANE
    pad = (-n_valid) % chunk
    if pad:
        flat_p = jnp.concatenate([flat_p, jnp.ones((pad,), flat_p.dtype)])
        flat_t = jnp.concatenate([flat_t, jnp.ones((pad,), flat_t.dtype)])
    rows = (n_valid + pad) // _LANE          # multiple of 8

    p2d = flat_p.reshape(rows, _LANE)
    t2d = flat_t.reshape(rows, _LANE)

    row_tile = min(row_tile, rows)           # both multiples of 8
    nblocks = pl.cdiv(rows, row_tile)        # row-blocks to reduce over
    num_parts = max(1, min(num_parts, nblocks))
    spp = pl.cdiv(nblocks, num_parts)        # reduction steps per part
    last_block = nblocks - 1

    def in_map(p, j):
        # Clamp so a fully out-of-range block (ragged nblocks/num_parts split)
        # re-reads the last block; its contribution is masked to 0 in-kernel.
        return (jnp.minimum(p * spp + j, last_block), 0)

    in_spec = pl.BlockSpec((row_tile, _LANE), in_map)
    out_spec = pl.BlockSpec((_SUB, _LANE), lambda p, j: (p, 0))

    partial = pl.pallas_call(
        functools.partial(_bce_kernel, rows=rows, row_tile=row_tile, spp=spp),
        out_shape=jax.ShapeDtypeStruct((num_parts * _SUB, _LANE), jnp.float32),
        grid_spec=pltpu.PrefetchScalarGridSpec(
            num_scalar_prefetch=0,
            grid=(num_parts, spp),
            in_specs=[in_spec, in_spec],
            out_specs=out_spec,
            scratch_shapes=[pltpu.VMEM((_SUB, _LANE), jnp.float32)],
        ),
        compiler_params=pltpu.CompilerParams(
            dimension_semantics=("parallel", "arbitrary")),
    )(p2d, t2d)

    # Tiny final cross-part / cross-lane reduce + mean, outside the kernel.
    return jnp.sum(partial) / jnp.float32(n_valid)


def _reference_bce(pred, target):
    log_p = jnp.maximum(jnp.log(pred), -100.0)
    log_1mp = jnp.maximum(jnp.log(1.0 - pred), -100.0)
    return jnp.mean(-(target * log_p + (1.0 - target) * log_1mp))


if __name__ == "__main__":
    key = jax.random.PRNGKey(0)

    # 1) Small NCHW shape consistent with the module (aligned, zero-copy path).
    kp, kt, key = (*jax.random.split(key, 2), None)
    shape = (2, 4, 16, 16)
    kp, kt = jax.random.split(jax.random.PRNGKey(0))
    pred = jax.random.uniform(kp, shape, jnp.float32, minval=1e-4, maxval=1.0 - 1e-4)
    target = (jax.random.uniform(kt, shape, jnp.float32) > 0.5).astype(jnp.float32)

    loss = jax.block_until_ready(binary_cross_entropy(pred, target))
    ref = _reference_bce(pred, target)
    assert jnp.allclose(loss, ref, rtol=1e-5, atol=1e-6), (loss, ref)

    # 2) Ragged shape (exercises the minimal-padding + in-kernel mask path).
    kp2, kt2 = jax.random.split(jax.random.PRNGKey(1))
    shape2 = (3, 5, 7, 11)
    pred2 = jax.random.uniform(kp2, shape2, jnp.float32, minval=1e-4, maxval=1.0 - 1e-4)
    target2 = (jax.random.uniform(kt2, shape2, jnp.float32) > 0.5).astype(jnp.float32)
    loss2 = jax.block_until_ready(binary_cross_entropy(pred2, target2))
    ref2 = _reference_bce(pred2, target2)
    assert jnp.allclose(loss2, ref2, rtol=1e-5, atol=1e-6), (loss2, ref2)

    # 3) Multi-block shape (exercises the 2-part parallel split + edge block).
    kp3, kt3 = jax.random.split(jax.random.PRNGKey(2))
    shape3 = (4, 8, 64, 70)   # 143360 elems -> 1120 rows, 2 row-blocks of 1024
    pred3 = jax.random.uniform(kp3, shape3, jnp.float32, minval=1e-4, maxval=1.0 - 1e-4)
    target3 = (jax.random.uniform(kt3, shape3, jnp.float32) > 0.5).astype(jnp.float32)
    loss3 = jax.block_until_ready(binary_cross_entropy(pred3, target3))
    ref3 = _reference_bce(pred3, target3)
    assert jnp.allclose(loss3, ref3, rtol=1e-5, atol=1e-6), (loss3, ref3)

    print("KERNEL_OK")
</pallas_src>

<mosaic_0001>
module attributes {stable_mosaic.version = 11 : i64} {
  func.func @_bce_kernel(%arg0: i32, %arg1: i32, %arg2: memref<16x128xf32, #tpu.memory_space<vmem>>, %arg3: memref<16x128xf32, #tpu.memory_space<vmem>>, %arg4: memref<8x128xf32, #tpu.memory_space<vmem>>, %arg5: memref<8x128xf32, #tpu.memory_space<vmem>>) attributes {dimension_semantics = [#tpu.dimension_semantics<parallel>, #tpu.dimension_semantics<arbitrary>], iteration_bounds = array<i64: 1, 1>, scalar_prefetch = 0 : i64, scratch_operands = 1 : i64, tpu.core_type = #tpu.core_type<tc>, window_params = [{transform_indices = @transform_0, window_bounds = array<i64: 16, 128>}, {transform_indices = @transform_1, window_bounds = array<i64: 16, 128>}, {transform_indices = @transform_2, window_bounds = array<i64: 8, 128>}]} {
    %c0_i32 = arith.constant 0 : i32
    %0 = arith.cmpi eq, %arg1, %c0_i32 : i32
    %1 = arith.extui %0 : i1 to i32
    %c0_i32_0 = arith.constant 0 : i32
    %2 = arith.cmpi ne, %1, %c0_i32_0 : i32
    scf.if %2 {
      %cst_17 = arith.constant 0.000000e+00 : f32
      %38 = vector.broadcast %cst_17 : f32 to vector<8x128xf32>
      %c0_18 = arith.constant 0 : index
      %c0_19 = arith.constant 0 : index
      %39 = vector.load %arg5[%c0_18, %c0_19] : memref<8x128xf32, #tpu.memory_space<vmem>>, vector<8x128xf32>
      tpu.vector_store %arg5[%c0_18, %c0_19], %38 {strides = array<i32>} : memref<8x128xf32, #tpu.memory_space<vmem>>, vector<8x128xf32>,
    } else {
    }
    %c1_i32 = arith.constant 1 : i32
    %3 = arith.muli %arg0, %c1_i32 : i32
    %4 = arith.addi %3, %arg1 : i32
    %c16_i32 = arith.constant 16 : i32
    %5 = arith.muli %4, %c16_i32 : i32
    %6 = tpu.iota {dimensions = array<i32: 0>} : vector<16x128xi32>
    %7 = vector.broadcast %5 : i32 to vector<16x128xi32>
    %8 = arith.addi %7, %6 : vector<16x128xi32>
    %c16_i32_1 = arith.constant 16 : i32
    %9 = vector.broadcast %c16_i32_1 : i32 to vector<16x128xi32>
    %10 = arith.cmpi slt, %8, %9 : vector<16x128xi32>
    %c0 = arith.constant 0 : index
    %c0_2 = arith.constant 0 : index
    %11 = vector.load %arg2[%c0, %c0_2] : memref<16x128xf32, #tpu.memory_space<vmem>>, vector<16x128xf32>
    %cst = arith.constant 1.000000e+00 : f32
    %12 = vector.broadcast %cst : f32 to vector<16x128xf32>
    %13 = arith.select %10, %11, %12 : vector<16x128xi1>, vector<16x128xf32>
    %c0_3 = arith.constant 0 : index
    %c0_4 = arith.constant 0 : index
    %14 = vector.load %arg3[%c0_3, %c0_4] : memref<16x128xf32, #tpu.memory_space<vmem>>, vector<16x128xf32>
    %cst_5 = arith.constant 1.000000e+00 : f32
    %15 = vector.broadcast %cst_5 : f32 to vector<16x128xf32>
    %16 = arith.select %10, %14, %15 : vector<16x128xi1>, vector<16x128xf32>
    %17 = math.log %13 : vector<16x128xf32>
    %cst_6 = arith.constant -1.000000e+02 : f32
    %18 = vector.broadcast %cst_6 : f32 to vector<16x128xf32>
    %19 = arith.maximumf %17, %18 : vector<16x128xf32>
    %cst_7 = arith.constant 1.000000e+00 : f32
    %20 = vector.broadcast %cst_7 : f32 to vector<16x128xf32>
    %21 = arith.subf %20, %13 : vector<16x128xf32>
    %22 = math.log %21 : vector<16x128xf32>
    %cst_8 = arith.constant -1.000000e+02 : f32
    %23 = vector.broadcast %cst_8 : f32 to vector<16x128xf32>
    %24 = arith.maximumf %22, %23 : vector<16x128xf32>
    %25 = arith.subf %19, %24 : vector<16x128xf32>
    %26 = arith.mulf %16, %25 : vector<16x128xf32>
    %27 = arith.addf %26, %24 : vector<16x128xf32>
    %cst_9 = arith.constant 0.000000e+00 : f32
    %28 = vector.broadcast %cst_9 : f32 to vector<16x128xf32>
    %29 = arith.subf %28, %27 : vector<16x128xf32>
    %c0_10 = arith.constant 0 : index
    %c0_11 = arith.constant 0 : index
    %30 = vector.load %arg5[%c0_10, %c0_11] : memref<8x128xf32, #tpu.memory_space<vmem>>, vector<8x128xf32>
    %31 = vector.shape_cast %29 : vector<16x128xf32> to vector<2x8x128xf32>
    %cst_12 = arith.constant dense<0.000000e+00> : vector<8x128xf32>
    %32 = vector.multi_reduction <add>, %31, %cst_12 [0] : vector<2x8x128xf32> to vector<8x128xf32>
    %33 = arith.addf %30, %32 : vector<8x128xf32>
    %c0_13 = arith.constant 0 : index
    %c0_14 = arith.constant 0 : index
    %34 = vector.load %arg5[%c0_13, %c0_14] : memref<8x128xf32, #tpu.memory_space<vmem>>, vector<8x128xf32>
    tpu.vector_store %arg5[%c0_13, %c0_14], %33 {strides = array<i32>} : memref<8x128xf32, #tpu.memory_space<vmem>>, vector<8x128xf32>,
    %c0_i32_15 = arith.constant 0 : i32
    %35 = arith.cmpi eq, %arg1, %c0_i32_15 : i32
    %36 = arith.extui %35 : i1 to i32
    %c0_i32_16 = arith.constant 0 : i32
    %37 = arith.cmpi ne, %36, %c0_i32_16 : i32
    scf.if %37 {
      %c0_17 = arith.constant 0 : index
      %c0_18 = arith.constant 0 : index
      %38 = vector.load %arg5[%c0_17, %c0_18] : memref<8x128xf32, #tpu.memory_space<vmem>>, vector<8x128xf32>
      %c0_19 = arith.constant 0 : index
      %c0_20 = arith.constant 0 : index
      %39 = vector.load %arg4[%c0_19, %c0_20] : memref<8x128xf32, #tpu.memory_space<vmem>>, vector<8x128xf32>
      tpu.vector_store %arg4[%c0_19, %c0_20], %38 {strides = array<i32>} : memref<8x128xf32, #tpu.memory_space<vmem>>, vector<8x128xf32>,
    } else {
    }
    return
  }
  func.func @transform_0(%arg0: i32, %arg1: i32) -> (i32, i32) {
    %c1_i32 = arith.constant 1 : i32
    %0 = arith.muli %arg0, %c1_i32 : i32
    %1 = arith.addi %0, %arg1 : i32
    %c0_i32 = arith.constant 0 : i32
    %2 = arith.minsi %1, %c0_i32 : i32
    %c0_i32_0 = arith.constant 0 : i32
    %c0_i32_1 = arith.constant 0 : i32
    return %2, %c0_i32_0 : i32, i32
  }
  func.func @transform_1(%arg0: i32, %arg1: i32) -> (i32, i32) {
    %c1_i32 = arith.constant 1 : i32
    %0 = arith.muli %arg0, %c1_i32 : i32
    %1 = arith.addi %0, %arg1 : i32
    %c0_i32 = arith.constant 0 : i32
    %2 = arith.minsi %1, %c0_i32 : i32
    %c0_i32_0 = arith.constant 0 : i32
    %c0_i32_1 = arith.constant 0 : i32
    return %2, %c0_i32_0 : i32, i32
  }
  func.func @transform_2(%arg0: i32, %arg1: i32) -> (i32, i32) {
    %c0_i32 = arith.constant 0 : i32
    %c0_i32_0 = arith.constant 0 : i32
    return %arg0, %c0_i32 : i32, i32
  }
}

</mosaic_0001>

<llo_original>
// kernel: tpu_custom_call.1
$region0: #{tpu_custom_call.1}
  #allocation0 [shape = 'u32[]', space=smem, size = 0x4, offset = 0x4, fixed_abs, tag = 'smem constant byte address 0x4 - core index']
  #allocation1 [shape = 'u32[144,128]{1,0:T(1,128)}', space=vmem, size = 0x12000, scoped, tag = 'internal scratch']
  #allocation2 [shape = 'f32[8,128]{1,0:T(8,128)}', space=vmem, size = 0x1000, scoped, tag = 'scratch operand']
  %s0 = inlined_call_operand.hbm [shape: f32[16,128], index: 0, kind: input, shape index: {}]
  %s1 = inlined_call_operand.hbm [shape: f32[16,128], index: 1, kind: input, shape index: {}]
  %s2 = inlined_call_operand.hbm [shape: f32[8,128], index: 2, kind: output, shape index: {}]
  %s3 = sld [smem:[#allocation0]]
  $region34: #{tpu_custom_call.1} parent=0
    _
  %s5 = ssub.s32 1, %s3
  %s6 = scalar_select 0, %s5, %s3
  $region1: #{tpu_custom_call.1} parent=0
    #allocation3 [shape = 'u8[8192]{0}', space=vmem, size = 0x2000, scoped, tag = 'input window, operand 0, single buffered']
    #allocation4 [shape = 's32[1]{0}', space=sflag, size = 0x4, scoped, tag = 'scoped memory for tpu_custom_call.1']
    #allocation5 [shape = 's32[1]{0}', space=sflag, size = 0x4, scoped, tag = 'scoped memory for tpu_custom_call.1']
    #allocation6 [shape = 'u8[8192]{0}', space=vmem, size = 0x2000, scoped, tag = 'input window, operand 1, single buffered']
    #allocation7 [shape = 's32[1]{0}', space=sflag, size = 0x4, scoped, tag = 'scoped memory for tpu_custom_call.1']
    #allocation8 [shape = 'u8[4096]{0}', space=vmem, size = 0x1000, scoped, tag = 'output window, operand 0, single buffered']
    %7 = vsyncpa [#allocation4], 0
    %8 = vsyncpa [#allocation7], 0
    %9 = vsyncpa [#allocation5], 0
    // Predicated region
    $region2: #{tpu_custom_call.1} parent=1 // pred_check
      _
    $region3: #{tpu_custom_call.1} parent=1 // pred_check_branch
      %11 = sbr.rel (0) target = $region5
    $region4: #{tpu_custom_call.1} parent=1 // pred_region
      %s12 = sadd.s32 0, 0
      %p13 = scmp.lt.s32.totalorder %s12, 0
      %s14 = scalar_select %p13, %s12, 0
      %s15 = smul.u32 2, %s14
      %s17 = ssub.s32 256, 256
      %18 = vsyncadd [#allocation4], %s17
      %s19 = smul.addr %s15, 128
      %s20 = scalar_lea.hbm %s0, %s19
      %s21 = sshll.u32 [#allocation3], 4
      %s22 = int_to_ptr.vmem [resolvable:$true] %s21
      %27 = dma.hbm_to_vmem [thread:$0]  %s20, 256, %s22, [#allocation4], 128, 128, 8
    $region5: #{tpu_custom_call.1} parent=1 // pred_fallthru
      _
    // Predicated region
    $region6: #{tpu_custom_call.1} parent=1 // pred_check
      _
    $region7: #{tpu_custom_call.1} parent=1 // pred_check_branch
      %29 = sbr.rel (0) target = $region9
    $region8: #{tpu_custom_call.1} parent=1 // pred_region
      %s30 = sadd.s32 0, 0
      %p31 = scmp.lt.s32.totalorder %s30, 0
      %s32 = scalar_select %p31, %s30, 0
      %s33 = smul.u32 2, %s32
      %s35 = ssub.s32 256, 256
      %36 = vsyncadd [#allocation7], %s35
      %s37 = smul.addr %s33, 128
      %s38 = scalar_lea.hbm %s1, %s37
      %s39 = sshll.u32 [#allocation6], 4
      %s40 = int_to_ptr.vmem [resolvable:$true] %s39
      %45 = dma.hbm_to_vmem [thread:$0]  %s38, 256, %s40, [#allocation7], 128, 128, 8
    $region9: #{tpu_custom_call.1} parent=1 // pred_fallthru
      _
    // Predicated region
    $region10: #{tpu_custom_call.1} parent=1 // pred_check
      _
    $region11: #{tpu_custom_call.1} parent=1 // pred_check_branch
      %47 = sbr.rel (0) target = $region13
    $region12: #{tpu_custom_call.1} parent=1 // pred_region
      %48 = dma.done [#allocation4], 256
    $region13: #{tpu_custom_call.1} parent=1 // pred_fallthru
      _
    // Predicated region
    $region14: #{tpu_custom_call.1} parent=1 // pred_check
      _
    $region15: #{tpu_custom_call.1} parent=1 // pred_check_branch
      %50 = sbr.rel (0) target = $region17
    $region16: #{tpu_custom_call.1} parent=1 // pred_region
      %51 = dma.done [#allocation7], 256
    $region17: #{tpu_custom_call.1} parent=1 // pred_fallthru
      _
    %s52 = sadd.s32 0, 0
    %p53 = scmp.lt.s32.totalorder %s52, 0
    %s54 = scalar_select %p53, %s52, 0
    %s55 = smul.u32 2, %s54
    %s56 = sadd.s32 0, 0
    %p57 = scmp.lt.s32.totalorder %s56, 0
    %s58 = scalar_select %p57, %s56, 0
    %s59 = smul.u32 2, %s58
    %p60 = scmp.eq.s32.totalorder 0, 0
    // Predicated region
    $region18: #{tpu_custom_call.1} parent=1 // pred_check
      %p61 = pneg %p60
    $region19: #{tpu_custom_call.1} parent=1 // pred_check_branch
      %63 = sbr.rel (%p61) target = $region21
    $region20: #{tpu_custom_call.1} parent=1 // pred_region
      %64 = vst [vmem:[#allocation2] sm:$0xff] 0.0
    $region21: #{tpu_custom_call.1} parent=1 // pred_fallthru
      _
    %s65 = sadd.s32 0, 0
    %s66 = smul.u32 %s65, 16
    %v67 = vlaneseq
    %v68 = vshrl.u32 %v67, 7
    %v69 = vadd.s32 %v68, 8
    %v70 = vstv %s66
    %v71 = vadd.s32 %v70, %v68
    %v72 = vadd.s32 %v70, %v69
    %vm73 = vcmp.lt.s32.totalorder %v71, 16
    %vm74 = vcmp.lt.s32.totalorder %v72, 16
    %v75 = vld [vmem:[#allocation3] sm:$0xff]
    %v76 = vld [vmem:[#allocation3 + $0x8] sm:$0xff]
    %v77 = vsel %vm73, %v75, 1.0
    %v78 = vsel %vm74, %v76, 1.0
    %v79 = vld [vmem:[#allocation6] sm:$0xff]
    %v80 = vld [vmem:[#allocation6 + $0x8] sm:$0xff]
    %v81 = vsel %vm73, %v79, 1.0
    %v82 = vsel %vm74, %v80, 1.0
    %v83 = vlog2.pop %v77
    %v84 = vmul.f32 %v83, 0.6931472
    %v85 = vlog2.pop %v78
    %v86 = vmul.f32 %v85, 0.6931472
    %v87 = vmax.f32 %v84, -100.0
    %v88 = vmax.f32 %v86, -100.0
    %v89 = vsub.f32 1.0, %v77
    %v90 = vsub.f32 1.0, %v78
    %v91 = vlog2.pop %v89
    %v92 = vmul.f32 %v91, 0.6931472
    %v93 = vlog2.pop %v90
    %v94 = vmul.f32 %v93, 0.6931472
    %v95 = vmax.f32 %v92, -100.0
    %v96 = vmax.f32 %v94, -100.0
    %v97 = vsub.f32 %v87, %v95
    %v98 = vsub.f32 %v88, %v96
    %v99 = vmul.f32 %v81, %v97
    %v100 = vmul.f32 %v82, %v98
    %v101 = vadd.f32 %v99, %v95
    %v102 = vadd.f32 %v100, %v96
    %v103 = vsub.f32 0.0, %v101
    %v104 = vsub.f32 0.0, %v102
    %v105 = vld [vmem:[#allocation2] sm:$0xff]
    %v106 = vadd.f32 %v103, %v104
    %v107 = vadd.f32 %v105, %v106
    %108 = vst [vmem:[#allocation2] sm:$0xff] %v107
    // Predicated region
    $region22: #{tpu_custom_call.1} parent=1 // pred_check
      %p109 = pneg %p60
    $region23: #{tpu_custom_call.1} parent=1 // pred_check_branch
      %111 = sbr.rel (%p109) target = $region25
    $region24: #{tpu_custom_call.1} parent=1 // pred_region
      %v112 = vld [vmem:[#allocation2] sm:$0xff]
      %113 = vst [vmem:[#allocation8] sm:$0xff] %v112
    $region25: #{tpu_custom_call.1} parent=1 // pred_fallthru
      _
    // Predicated region
    $region26: #{tpu_custom_call.1} parent=1 // pred_check
      _
    $region27: #{tpu_custom_call.1} parent=1 // pred_check_branch
      %115 = sbr.rel (0) target = $region29
    $region28: #{tpu_custom_call.1} parent=1 // pred_region
      %s117 = ssub.s32 128, 128
      %118 = vsyncadd [#allocation5], %s117
      %s120 = sshll.u32 [#allocation8], 4
      %s121 = int_to_ptr.vmem [resolvable:$true] %s120
      %123 = dma.vmem_to_hbm [thread:$0]  %s121, 128, %s2, [#allocation5]
    $region29: #{tpu_custom_call.1} parent=1 // pred_fallthru
      _
    // Predicated region
    $region30: #{tpu_custom_call.1} parent=1 // pred_check
      _
    $region31: #{tpu_custom_call.1} parent=1 // pred_check_branch
      %125 = sbr.rel (0) target = $region33
    $region32: #{tpu_custom_call.1} parent=1 // pred_region
      %126 = dma.done [#allocation5], 128
    $region33: #{tpu_custom_call.1} parent=1 // pred_fallthru
      _
    %127 = vsyncpa [#allocation4], 1
    %128 = vsyncpa [#allocation7], 1
    %129 = vsyncpa [#allocation5], 1

</llo_original>
